<compile_context>
chip_gen: v6e
topology: v6e:2x2x1
jax: 0.10.0
libtpu: 0.0.40
codegen_flags: <defaults>
</compile_context>

<pallas_src>
import functools

import jax
import jax.numpy as jnp
from jax import lax
from jax.experimental import pallas as pl
from jax.experimental.pallas import tpu as pltpu


def _round_up(x, m):
    return ((x + m - 1) // m) * m


def _contrastive_kernel(face_ref, audio_ref, out_ref,
                        fn_ref, m_ref, l_ref, diag_ref,
                        *, b_real, tile, pad_cols):
    i = pl.program_id(0)
    j = pl.program_id(1)
    nj = pl.num_programs(1)

    @pl.when(j == 0)
    def _init():
        # Normalize the resident face row-tile once per i; cache in VMEM.
        f = face_ref[...]
        fn_ref[...] = f * lax.rsqrt(
            jnp.maximum(jnp.sum(f * f, axis=1, keepdims=True), 1e-24))
        m_ref[...] = jnp.full_like(m_ref, -jnp.inf)
        l_ref[...] = jnp.zeros_like(l_ref)
        diag_ref[...] = jnp.zeros_like(diag_ref)

    # F.normalize(audio, p=2, dim=1): rsqrt (EUP) + mul (VPU), no divide.
    a = audio_ref[...]                      # (tile, D_pad) f32, streamed over j
    an = a * lax.rsqrt(jnp.maximum(jnp.sum(a * a, axis=1, keepdims=True), 1e-24))
    fn = fn_ref[...]                        # cached normalized face tile

    # gram[r, c] = <fn_r, an_c>; contraction on dim 1 of both => MXU consumes
    # [M,K] x [N,K] directly, no materialized transpose.
    gram = lax.dot_general(fn, an, (((1,), (1,)), ((), ())),
                           preferred_element_type=jnp.float32)

    # Unit rows => ||f_r - a_c||^2 = 2 - 2 * <f_r, a_c>.
    d2 = 2.0 - 2.0 * gram
    # cross = 1 / (sqrt(d2) + 1e-8)  ~=  clamped rsqrt(d2): one EUP op.
    cross = jnp.minimum(lax.rsqrt(jnp.maximum(d2, 1e-16)), 1e8)

    if pad_cols:  # static Python condition: only emitted when batch is padded
        col_ids = lax.broadcasted_iota(jnp.int32, (1, tile), 1) + j * tile
        cross = jnp.where(col_ids < b_real, cross, -1e30)

    # Online softmax over the logits (dim=1), streamed over j.
    m_prev = m_ref[...]
    m_new = jnp.maximum(m_prev, jnp.max(cross, axis=1, keepdims=True))
    alpha = jnp.exp(m_prev - m_new)
    l_ref[...] = alpha * l_ref[...] + jnp.sum(jnp.exp(cross - m_new),
                                              axis=1, keepdims=True)
    m_ref[...] = m_new

    # Label (diagonal) logit: extract from the already-computed cross slab,
    # only on the diagonal block -- exactly the same values the softmax saw.
    @pl.when(i == j)
    def _diag():
        r = lax.broadcasted_iota(jnp.int32, (tile, tile), 0)
        c = lax.broadcasted_iota(jnp.int32, (tile, tile), 1)
        diag_ref[...] = jnp.sum(jnp.where(r == c, cross, 0.0),
                                axis=1, keepdims=True)

    @pl.when(j == nj - 1)
    def _finalize():
        # per-sample CE loss: logsumexp_j(cross) - cross_ii
        out_ref[...] = (m_ref[...] + jnp.log(l_ref[...])) - diag_ref[...]


def softmax_contrastive_loss(face_feat, audio_feat, *, tile_rows=256):
    """face_feat, audio_feat: [B, D] -> scalar f32 loss (mean cross-entropy)."""
    B, D = face_feat.shape
    assert audio_feat.shape == (B, D)

    # Pad feature axis to the 128-wide lane axis; pad batch to a multiple of
    # the tile.  Zero-padding does not change norms or dot products.
    d_pad = max(128, _round_up(D, 128))
    tile = min(tile_rows, _round_up(B, 8))
    b_pad = _round_up(B, tile)

    f = jnp.pad(face_feat.astype(jnp.float32), ((0, b_pad - B), (0, d_pad - D)))
    a = jnp.pad(audio_feat.astype(jnp.float32), ((0, b_pad - B), (0, d_pad - D)))

    n_tiles = b_pad // tile
    kernel = functools.partial(_contrastive_kernel,
                               b_real=B, tile=tile, pad_cols=(b_pad != B))

    per_row = pl.pallas_call(
        kernel,
        out_shape=jax.ShapeDtypeStruct((b_pad, 1), jnp.float32),
        grid_spec=pltpu.PrefetchScalarGridSpec(
            num_scalar_prefetch=0,
            grid=(n_tiles, n_tiles),  # (row tiles, col tiles); reduction axis last
            in_specs=[
                pl.BlockSpec((tile, d_pad), lambda i, j: (i, 0)),  # face: row-resident
                pl.BlockSpec((tile, d_pad), lambda i, j: (j, 0)),  # audio: streamed
            ],
            out_specs=pl.BlockSpec((tile, 1), lambda i, j: (i, 0)),
            scratch_shapes=[pltpu.VMEM((tile, d_pad), jnp.float32),  # cached fn
                            pltpu.VMEM((tile, 1), jnp.float32),      # m (running max)
                            pltpu.VMEM((tile, 1), jnp.float32),      # l (running sum)
                            pltpu.VMEM((tile, 1), jnp.float32)],     # diag logit
        ),
        compiler_params=pltpu.CompilerParams(
            dimension_semantics=("parallel", "arbitrary")),
        cost_estimate=pl.CostEstimate(
            flops=2 * b_pad * b_pad * d_pad + 10 * b_pad * b_pad,
            transcendentals=2 * b_pad * b_pad + 2 * b_pad,
            bytes_accessed=4 * (2 * b_pad * d_pad + 2 * b_pad)),
    )(f, a)

    # Finish the mean in JAX; padded rows are sliced off.
    return jnp.mean(per_row[:B, 0])


def _reference_loss(face_feat, audio_feat):
    """Plain-JAX reference matching the PyTorch forward semantics exactly."""
    def l2n(x):
        n = jnp.sqrt(jnp.sum(x * x, axis=1, keepdims=True))
        return x / jnp.maximum(n, 1e-12)

    f = l2n(face_feat)
    a = l2n(audio_feat)
    diff = f[:, None, :] - a[None, :, :]                 # (B, B, D)
    dist = jnp.sqrt(jnp.sum(diff * diff, axis=2))        # (B, B)
    cross = jnp.maximum(1.0 / (dist + 1e-8), 1e-8)       # torch.clamp(., min=1e-8)
    B = f.shape[0]
    logp = cross - jax.scipy.special.logsumexp(cross, axis=1, keepdims=True)
    return -jnp.mean(logp[jnp.arange(B), jnp.arange(B)])


if __name__ == "__main__":
    key = jax.random.PRNGKey(0)

    # Test 1: small shape matching the module's demo usage (single tile).
    B, D = 8, 32
    k1, k2 = jax.random.split(key)
    face_feat = jax.random.normal(k1, (B, D), dtype=jnp.float32)
    audio_feat = jax.random.normal(k2, (B, D), dtype=jnp.float32)

    loss = jax.block_until_ready(softmax_contrastive_loss(face_feat, audio_feat))
    ref = jax.block_until_ready(_reference_loss(face_feat, audio_feat))
    assert jnp.isfinite(loss), "kernel produced non-finite loss"
    assert abs(float(loss) - float(ref)) < 1e-4, (float(loss), float(ref))

    # Test 2: non-divisible batch with tiny tiles to exercise the multi-tile
    # grid, online softmax across col-tiles, diagonal-block path and padding.
    B2, D2 = 20, 40
    k3, k4 = jax.random.split(k2)
    face2 = jax.random.normal(k3, (B2, D2), dtype=jnp.float32)
    audio2 = jax.random.normal(k4, (B2, D2), dtype=jnp.float32)

    loss2 = jax.block_until_ready(
        softmax_contrastive_loss(face2, audio2, tile_rows=8))
    ref2 = jax.block_until_ready(_reference_loss(face2, audio2))
    assert jnp.isfinite(loss2), "kernel produced non-finite loss (tiled case)"
    assert abs(float(loss2) - float(ref2)) < 1e-4, (float(loss2), float(ref2))

    print("KERNEL_OK")
</pallas_src>

<mosaic_0001>
module attributes {stable_mosaic.version = 11 : i64} {
  func.func @_contrastive_kernel(%arg0: i32, %arg1: i32, %arg2: memref<8x128xf32, #tpu.memory_space<vmem>>, %arg3: memref<8x128xf32, #tpu.memory_space<vmem>>, %arg4: memref<8x1xf32, #tpu.memory_space<vmem>>, %arg5: memref<8x128xf32, #tpu.memory_space<vmem>>, %arg6: memref<8x1xf32, #tpu.memory_space<vmem>>, %arg7: memref<8x1xf32, #tpu.memory_space<vmem>>, %arg8: memref<8x1xf32, #tpu.memory_space<vmem>>) attributes {dimension_semantics = [#tpu.dimension_semantics<parallel>, #tpu.dimension_semantics<arbitrary>], iteration_bounds = array<i64: 1, 1>, scalar_prefetch = 0 : i64, scratch_operands = 4 : i64, tpu.core_type = #tpu.core_type<tc>, window_params = [{transform_indices = @transform_0, window_bounds = array<i64: 8, 128>}, {transform_indices = @transform_1, window_bounds = array<i64: 8, 128>}, {transform_indices = @transform_2, window_bounds = array<i64: 8, 1>}]} {
    %c0_i32 = arith.constant 0 : i32
    %0 = arith.cmpi eq, %arg1, %c0_i32 : i32
    %1 = arith.extui %0 : i1 to i32
    %c0_i32_0 = arith.constant 0 : i32
    %2 = arith.cmpi ne, %1, %c0_i32_0 : i32
    scf.if %2 {
      %c0_23 = arith.constant 0 : index
      %c0_24 = arith.constant 0 : index
      %45 = vector.load %arg2[%c0_23, %c0_24] : memref<8x128xf32, #tpu.memory_space<vmem>>, vector<8x128xf32>
      %46 = arith.mulf %45, %45 : vector<8x128xf32>
      %cst_25 = arith.constant dense<0.000000e+00> : vector<8xf32>
      %47 = vector.multi_reduction <add>, %46, %cst_25 [1] : vector<8x128xf32> to vector<8xf32>
      %48 = vector.shape_cast %47 : vector<8xf32> to vector<8x1xf32>
      %cst_26 = arith.constant 1.000000e-24 : f32
      %49 = vector.broadcast %cst_26 : f32 to vector<8x1xf32>
      %50 = arith.maximumf %48, %49 : vector<8x1xf32>
      %51 = math.rsqrt %50 : vector<8x1xf32>
      %52 = vector.broadcast %51 : vector<8x1xf32> to vector<8x128xf32>
      %53 = arith.mulf %45, %52 : vector<8x128xf32>
      %c0_27 = arith.constant 0 : index
      %c0_28 = arith.constant 0 : index
      %54 = vector.load %arg5[%c0_27, %c0_28] : memref<8x128xf32, #tpu.memory_space<vmem>>, vector<8x128xf32>
      tpu.vector_store %arg5[%c0_27, %c0_28], %53 {strides = array<i32>} : memref<8x128xf32, #tpu.memory_space<vmem>>, vector<8x128xf32>,
      %cst_29 = arith.constant 0xFF800000 : f32
      %55 = vector.broadcast %cst_29 : f32 to vector<8x1xf32>
      %c0_30 = arith.constant 0 : index
      %c0_31 = arith.constant 0 : index
      %56 = vector.load %arg6[%c0_30, %c0_31] : memref<8x1xf32, #tpu.memory_space<vmem>>, vector<8x1xf32>
      tpu.vector_store %arg6[%c0_30, %c0_31], %55 {strides = array<i32>} : memref<8x1xf32, #tpu.memory_space<vmem>>, vector<8x1xf32>,
      %cst_32 = arith.constant 0.000000e+00 : f32
      %57 = vector.broadcast %cst_32 : f32 to vector<8x1xf32>
      %c0_33 = arith.constant 0 : index
      %c0_34 = arith.constant 0 : index
      %58 = vector.load %arg7[%c0_33, %c0_34] : memref<8x1xf32, #tpu.memory_space<vmem>>, vector<8x1xf32>
      tpu.vector_store %arg7[%c0_33, %c0_34], %57 {strides = array<i32>} : memref<8x1xf32, #tpu.memory_space<vmem>>, vector<8x1xf32>,
      %cst_35 = arith.constant 0.000000e+00 : f32
      %59 = vector.broadcast %cst_35 : f32 to vector<8x1xf32>
      %c0_36 = arith.constant 0 : index
      %c0_37 = arith.constant 0 : index
      %60 = vector.load %arg8[%c0_36, %c0_37] : memref<8x1xf32, #tpu.memory_space<vmem>>, vector<8x1xf32>
      tpu.vector_store %arg8[%c0_36, %c0_37], %59 {strides = array<i32>} : memref<8x1xf32, #tpu.memory_space<vmem>>, vector<8x1xf32>,
    } else {
    }
    %c0 = arith.constant 0 : index
    %c0_1 = arith.constant 0 : index
    %3 = vector.load %arg3[%c0, %c0_1] : memref<8x128xf32, #tpu.memory_space<vmem>>, vector<8x128xf32>
    %4 = arith.mulf %3, %3 : vector<8x128xf32>
    %cst = arith.constant dense<0.000000e+00> : vector<8xf32>
    %5 = vector.multi_reduction <add>, %4, %cst [1] : vector<8x128xf32> to vector<8xf32>
    %6 = vector.shape_cast %5 : vector<8xf32> to vector<8x1xf32>
    %cst_2 = arith.constant 1.000000e-24 : f32
    %7 = vector.broadcast %cst_2 : f32 to vector<8x1xf32>
    %8 = arith.maximumf %6, %7 : vector<8x1xf32>
    %9 = math.rsqrt %8 : vector<8x1xf32>
    %10 = vector.broadcast %9 : vector<8x1xf32> to vector<8x128xf32>
    %11 = arith.mulf %3, %10 : vector<8x128xf32>
    %c0_3 = arith.constant 0 : index
    %c0_4 = arith.constant 0 : index
    %12 = vector.load %arg5[%c0_3, %c0_4] : memref<8x128xf32, #tpu.memory_space<vmem>>, vector<8x128xf32>
    %cst_5 = arith.constant dense<0.000000e+00> : vector<8x8xf32>
    %13 = tpu.matmul %12, %11, %cst_5 {dimension_numbers = #tpu.dot_dimension_numbers<[1], [1], [0], [0], [0, 0, 1, 0], [], []>} : vector<8x128xf32>, vector<8x128xf32>, vector<8x8xf32> -> vector<8x8xf32>
    %cst_6 = arith.constant 2.000000e+00 : f32
    %14 = vector.broadcast %cst_6 : f32 to vector<8x8xf32>
    %15 = arith.mulf %14, %13 : vector<8x8xf32>
    %cst_7 = arith.constant 2.000000e+00 : f32
    %16 = vector.broadcast %cst_7 : f32 to vector<8x8xf32>
    %17 = arith.subf %16, %15 : vector<8x8xf32>
    %cst_8 = arith.constant 1.000000e-16 : f32
    %18 = vector.broadcast %cst_8 : f32 to vector<8x8xf32>
    %19 = arith.maximumf %17, %18 : vector<8x8xf32>
    %20 = math.rsqrt %19 : vector<8x8xf32>
    %cst_9 = arith.constant 1.000000e+08 : f32
    %21 = vector.broadcast %cst_9 : f32 to vector<8x8xf32>
    %22 = arith.minimumf %20, %21 : vector<8x8xf32>
    %c0_10 = arith.constant 0 : index
    %c0_11 = arith.constant 0 : index
    %23 = vector.load %arg6[%c0_10, %c0_11] : memref<8x1xf32, #tpu.memory_space<vmem>>, vector<8x1xf32>
    %cst_12 = arith.constant dense<0xFF800000> : vector<8xf32>
    %24 = vector.multi_reduction <maximumf>, %22, %cst_12 [1] : vector<8x8xf32> to vector<8xf32>
    %25 = vector.shape_cast %24 : vector<8xf32> to vector<8x1xf32>
    %26 = arith.maximumf %23, %25 : vector<8x1xf32>
    %27 = arith.subf %23, %26 : vector<8x1xf32>
    %28 = math.exp %27 : vector<8x1xf32>
    %c0_13 = arith.constant 0 : index
    %c0_14 = arith.constant 0 : index
    %29 = vector.load %arg7[%c0_13, %c0_14] : memref<8x1xf32, #tpu.memory_space<vmem>>, vector<8x1xf32>
    %30 = arith.mulf %28, %29 : vector<8x1xf32>
    %31 = vector.broadcast %26 : vector<8x1xf32> to vector<8x8xf32>
    %32 = arith.subf %22, %31 : vector<8x8xf32>
    %33 = math.exp %32 : vector<8x8xf32>
    %cst_15 = arith.constant dense<0.000000e+00> : vector<8xf32>
    %34 = vector.multi_reduction <add>, %33, %cst_15 [1] : vector<8x8xf32> to vector<8xf32>
    %35 = vector.shape_cast %34 : vector<8xf32> to vector<8x1xf32>
    %36 = arith.addf %30, %35 : vector<8x1xf32>
    %c0_16 = arith.constant 0 : index
    %c0_17 = arith.constant 0 : index
    %37 = vector.load %arg7[%c0_16, %c0_17] : memref<8x1xf32, #tpu.memory_space<vmem>>, vector<8x1xf32>
    tpu.vector_store %arg7[%c0_16, %c0_17], %36 {strides = array<i32>} : memref<8x1xf32, #tpu.memory_space<vmem>>, vector<8x1xf32>,
    %c0_18 = arith.constant 0 : index
    %c0_19 = arith.constant 0 : index
    %38 = vector.load %arg6[%c0_18, %c0_19] : memref<8x1xf32, #tpu.memory_space<vmem>>, vector<8x1xf32>
    tpu.vector_store %arg6[%c0_18, %c0_19], %26 {strides = array<i32>} : memref<8x1xf32, #tpu.memory_space<vmem>>, vector<8x1xf32>,
    %39 = arith.cmpi eq, %arg0, %arg1 : i32
    %40 = arith.extui %39 : i1 to i32
    %c0_i32_20 = arith.constant 0 : i32
    %41 = arith.cmpi ne, %40, %c0_i32_20 : i32
    scf.if %41 {
      %45 = tpu.iota {dimensions = array<i32: 0>} : vector<8x8xi32>
      %46 = tpu.iota {dimensions = array<i32: 1>} : vector<8x8xi32>
      %47 = arith.cmpi eq, %45, %46 : vector<8x8xi32>
      %cst_23 = arith.constant 0.000000e+00 : f32
      %48 = vector.broadcast %cst_23 : f32 to vector<8x8xf32>
      %49 = arith.select %47, %22, %48 : vector<8x8xi1>, vector<8x8xf32>
      %cst_24 = arith.constant dense<0.000000e+00> : vector<8xf32>
      %50 = vector.multi_reduction <add>, %49, %cst_24 [1] : vector<8x8xf32> to vector<8xf32>
      %51 = vector.shape_cast %50 : vector<8xf32> to vector<8x1xf32>
      %c0_25 = arith.constant 0 : index
      %c0_26 = arith.constant 0 : index
      %52 = vector.load %arg8[%c0_25, %c0_26] : memref<8x1xf32, #tpu.memory_space<vmem>>, vector<8x1xf32>
      tpu.vector_store %arg8[%c0_25, %c0_26], %51 {strides = array<i32>} : memref<8x1xf32, #tpu.memory_space<vmem>>, vector<8x1xf32>,
    } else {
    }
    %c0_i32_21 = arith.constant 0 : i32
    %42 = arith.cmpi eq, %arg1, %c0_i32_21 : i32
    %43 = arith.extui %42 : i1 to i32
    %c0_i32_22 = arith.constant 0 : i32
    %44 = arith.cmpi ne, %43, %c0_i32_22 : i32
    scf.if %44 {
      %c0_23 = arith.constant 0 : index
      %c0_24 = arith.constant 0 : index
      %45 = vector.load %arg6[%c0_23, %c0_24] : memref<8x1xf32, #tpu.memory_space<vmem>>, vector<8x1xf32>
      %c0_25 = arith.constant 0 : index
      %c0_26 = arith.constant 0 : index
      %46 = vector.load %arg7[%c0_25, %c0_26] : memref<8x1xf32, #tpu.memory_space<vmem>>, vector<8x1xf32>
      %47 = math.log %46 : vector<8x1xf32>
      %48 = arith.addf %45, %47 : vector<8x1xf32>
      %c0_27 = arith.constant 0 : index
      %c0_28 = arith.constant 0 : index
      %49 = vector.load %arg8[%c0_27, %c0_28] : memref<8x1xf32, #tpu.memory_space<vmem>>, vector<8x1xf32>
      %50 = arith.subf %48, %49 : vector<8x1xf32>
      %c0_29 = arith.constant 0 : index
      %c0_30 = arith.constant 0 : index
      %51 = vector.load %arg4[%c0_29, %c0_30] : memref<8x1xf32, #tpu.memory_space<vmem>>, vector<8x1xf32>
      tpu.vector_store %arg4[%c0_29, %c0_30], %50 {strides = array<i32>} : memref<8x1xf32, #tpu.memory_space<vmem>>, vector<8x1xf32>,
    } else {
    }
    return
  }
  func.func @transform_0(%arg0: i32, %arg1: i32) -> (i32, i32) {
    %c0_i32 = arith.constant 0 : i32
    %c0_i32_0 = arith.constant 0 : i32
    return %arg0, %c0_i32 : i32, i32
  }
  func.func @transform_1(%arg0: i32, %arg1: i32) -> (i32, i32) {
    %c0_i32 = arith.constant 0 : i32
    %c0_i32_0 = arith.constant 0 : i32
    return %arg1, %c0_i32 : i32, i32
  }
  func.func @transform_2(%arg0: i32, %arg1: i32) -> (i32, i32) {
    %c0_i32 = arith.constant 0 : i32
    %c0_i32_0 = arith.constant 0 : i32
    return %arg0, %c0_i32 : i32, i32
  }
}

</mosaic_0001>

<llo_original>
// kernel: tpu_custom_call.1
$region0: #{tpu_custom_call.1}
  #allocation0 [shape = 'u32[]', space=smem, size = 0x4, offset = 0x4, fixed_abs, tag = 'smem constant byte address 0x4 - core index']
  #allocation1 [shape = 'u32[144,128]{1,0:T(1,128)}', space=vmem, size = 0x12000, scoped, tag = 'internal scratch']
  #allocation2 [shape = 'f32[8,128]{1,0:T(8,128)}', space=vmem, size = 0x1000, scoped, tag = 'scratch operand']
  #allocation3 [shape = 'f32[8,1]{1,0:T(8,128)}', space=vmem, size = 0x1000, scoped, tag = 'scratch operand']
  #allocation4 [shape = 'f32[8,1]{1,0:T(8,128)}', space=vmem, size = 0x1000, scoped, tag = 'scratch operand']
  #allocation5 [shape = 'f32[8,1]{1,0:T(8,128)}', space=vmem, size = 0x1000, scoped, tag = 'scratch operand']
  %s0 = inlined_call_operand.hbm [shape: f32[8,128], index: 0, kind: input, shape index: {}]
  %s1 = inlined_call_operand.hbm [shape: f32[8,128], index: 1, kind: input, shape index: {}]
  %s2 = inlined_call_operand.vmem [shape: f32[8,1], index: 2, kind: output, shape index: {}]
  %s3 = sld [smem:[#allocation0]]
  $region38: #{tpu_custom_call.1} parent=0
    _
  %s5 = ssub.s32 1, %s3
  %s6 = scalar_select 0, %s5, %s3
  $region1: #{tpu_custom_call.1} parent=0
    #allocation6 [shape = 'u8[4096]{0}', space=vmem, size = 0x1000, scoped, tag = 'input window, operand 0, single buffered']
    #allocation7 [shape = 's32[1]{0}', space=sflag, size = 0x4, scoped, tag = 'scoped memory for tpu_custom_call.1']
    #allocation8 [shape = 'u8[4096]{0}', space=vmem, size = 0x1000, scoped, tag = 'input window, operand 1, single buffered']
    #allocation9 [shape = 's32[1]{0}', space=sflag, size = 0x4, scoped, tag = 'scoped memory for tpu_custom_call.1']
    %7 = vsyncpa [#allocation7], 0
    %8 = vsyncpa [#allocation9], 0
    // Predicated region
    $region2: #{tpu_custom_call.1} parent=1 // pred_check
      _
    $region3: #{tpu_custom_call.1} parent=1 // pred_check_branch
      %10 = sbr.rel (0) target = $region5
    $region4: #{tpu_custom_call.1} parent=1 // pred_region
      %s12 = ssub.s32 128, 128
      %13 = vsyncadd [#allocation7], %s12
      %s15 = sshll.u32 [#allocation6], 4
      %s16 = int_to_ptr.vmem [resolvable:$true] %s15
      %18 = dma.hbm_to_vmem [thread:$0]  %s0, 128, %s16, [#allocation7]
    $region5: #{tpu_custom_call.1} parent=1 // pred_fallthru
      _
    // Predicated region
    $region6: #{tpu_custom_call.1} parent=1 // pred_check
      _
    $region7: #{tpu_custom_call.1} parent=1 // pred_check_branch
      %20 = sbr.rel (0) target = $region9
    $region8: #{tpu_custom_call.1} parent=1 // pred_region
      %s22 = ssub.s32 128, 128
      %23 = vsyncadd [#allocation9], %s22
      %s25 = sshll.u32 [#allocation8], 4
      %s26 = int_to_ptr.vmem [resolvable:$true] %s25
      %28 = dma.hbm_to_vmem [thread:$0]  %s1, 128, %s26, [#allocation9]
    $region9: #{tpu_custom_call.1} parent=1 // pred_fallthru
      _
    // Predicated region
    $region10: #{tpu_custom_call.1} parent=1 // pred_check
      _
    $region11: #{tpu_custom_call.1} parent=1 // pred_check_branch
      %30 = sbr.rel (0) target = $region13
    $region12: #{tpu_custom_call.1} parent=1 // pred_region
      %31 = dma.done [#allocation7], 128
    $region13: #{tpu_custom_call.1} parent=1 // pred_fallthru
      _
    // Predicated region
    $region14: #{tpu_custom_call.1} parent=1 // pred_check
      _
    $region15: #{tpu_custom_call.1} parent=1 // pred_check_branch
      %33 = sbr.rel (0) target = $region17
    $region16: #{tpu_custom_call.1} parent=1 // pred_region
      %34 = dma.done [#allocation9], 128
    $region17: #{tpu_custom_call.1} parent=1 // pred_fallthru
      _
    %p35 = scmp.eq.s32.totalorder 0, 0
    // Predicated region
    $region18: #{tpu_custom_call.1} parent=1 // pred_check
      %p36 = pneg %p35
    $region19: #{tpu_custom_call.1} parent=1 // pred_check_branch
      %38 = sbr.rel (%p36) target = $region21
    $region20: #{tpu_custom_call.1} parent=1 // pred_region
      %v39 = vld [vmem:[#allocation6] sm:$0xff]
      %v40 = vmul.f32 %v39, %v39
      %41 = vadd.xlane.f32.xlu0 %v40
      %v42 = vpop.xlane.xlu0 %41
      %v43 = vmax.f32 %v42, 1e-24
      %v44 = vrsqrt.pop %v43
      %v45 = vmul.f32 %v39, %v44
      %46 = vst [vmem:[#allocation2] sm:$0xff] %v45
      %vm47 = vcmask 7168
      %48 = vst.msk [vmem:[#allocation3] sm:$0xff] %vm47, -inf
      %49 = vst.msk [vmem:[#allocation4] sm:$0xff] %vm47, 0.0
      %50 = vst.msk [vmem:[#allocation5] sm:$0xff] %vm47, 0.0
    $region21: #{tpu_custom_call.1} parent=1 // pred_fallthru
      _
    %v51 = vld [vmem:[#allocation8] sm:$0xff]
    %v52 = vmul.f32 %v51, %v51
    %53 = vadd.xlane.f32.xlu0 %v52
    %v54 = vpop.xlane.xlu0 %53
    %v55 = vmax.f32 %v54, 1e-24
    %v56 = vrsqrt.pop %v55
    %v57 = vmul.f32 %v51, %v56
    %v58 = vld [vmem:[#allocation2] sm:$0xff]
    %59 = vmatprep.subr.mxu0 0.0
    %60 = vmatpush1.xpose.msra.mxu0 0.0
    %61 = vmatprep.subr.mxu0 0.0
    %62 = vmatpush1.xpose.msra.mxu0 0.0
    %63 = vmatprep.subr.mxu0 0.0
    %64 = vmatpush1.xpose.msra.mxu0 0.0
    %65 = vmatprep.subr.mxu0 0.0
    %66 = vmatpush1.xpose.msra.mxu0 0.0
    %67 = vmatprep.subr.mxu0 0.0
    %68 = vmatpush1.xpose.msra.mxu0 0.0
    %69 = vmatprep.subr.mxu0 0.0
    %70 = vmatpush1.xpose.msra.mxu0 0.0
    %71 = vmatprep.subr.mxu0 0.0
    %72 = vmatpush1.xpose.msra.mxu0 0.0
    %73 = vmatprep.subr.mxu0 0.0
    %74 = vmatpush1.xpose.msra.mxu0 0.0
    %75 = vmatprep.subr.mxu0 0.0
    %76 = vmatpush1.xpose.msra.mxu0 0.0
    %77 = vmatprep.subr.mxu0 0.0
    %78 = vmatpush1.xpose.msra.mxu0 0.0
    %79 = vmatprep.subr.mxu0 0.0
    %80 = vmatpush1.xpose.msra.mxu0 0.0
    %81 = vmatprep.subr.mxu0 0.0
    %82 = vmatpush1.xpose.msra.mxu0 0.0
    %83 = vmatprep.subr.mxu0 0.0
    %84 = vmatpush1.xpose.msra.mxu0 0.0
    %85 = vmatprep.subr.mxu0 0.0
    %86 = vmatpush1.xpose.msra.mxu0 0.0
    %87 = vmatprep.subr.mxu0 0.0
    %88 = vmatpush1.xpose.msra.mxu0 0.0
    %89 = vmatprep.subr.mxu0 0.0
    %90 = vmatpush1.xpose.msra.mxu0 %v57
    %91 = vmatprep.subr.mxu0 0.0
    %92 = vmatpush2.xpose.msra.mxu0 0.0
    %93 = vmatprep.subr.mxu0 0.0
    %94 = vmatpush2.xpose.msra.mxu0 0.0
    %95 = vmatprep.subr.mxu0 0.0
    %96 = vmatpush2.xpose.msra.mxu0 0.0
    %97 = vmatprep.subr.mxu0 0.0
    %98 = vmatpush2.xpose.msra.mxu0 0.0
    %99 = vmatprep.subr.mxu0 0.0
    %100 = vmatpush2.xpose.msra.mxu0 0.0
    %101 = vmatprep.subr.mxu0 0.0
    %102 = vmatpush2.xpose.msra.mxu0 0.0
    %103 = vmatprep.subr.mxu0 0.0
    %104 = vmatpush2.xpose.msra.mxu0 0.0
    %105 = vmatprep.subr.mxu0 0.0
    %106 = vmatpush2.xpose.msra.mxu0 0.0
    %107 = vmatprep.subr.mxu0 0.0
    %108 = vmatpush2.xpose.msra.mxu0 0.0
    %109 = vmatprep.subr.mxu0 0.0
    %110 = vmatpush2.xpose.msra.mxu0 0.0
    %111 = vmatprep.subr.mxu0 0.0
    %112 = vmatpush2.xpose.msra.mxu0 0.0
    %113 = vmatprep.subr.mxu0 0.0
    %114 = vmatpush2.xpose.msra.mxu0 0.0
    %115 = vmatprep.subr.mxu0 0.0
    %116 = vmatpush2.xpose.msra.mxu0 0.0
    %117 = vmatprep.subr.mxu0 0.0
    %118 = vmatpush2.xpose.msra.mxu0 0.0
    %119 = vmatprep.subr.mxu0 0.0
    %120 = vmatpush2.xpose.msra.mxu0 0.0
    %121 = vmatprep.subr.mxu0 0.0
    %122 = vmatpush2.xpose.msra.mxu0 0.0
    %123 = vmatprep.mubr.f32.mxu0 0.0
    %124 = vmatmul.mubr.f32.gmra.mxu0 %v58
    %v125 = vpop.f32.mrf.mxu0
    %v126 = vadd.f32 0.0, %v125
    %v127 = vpop.f32.mrf.mxu0
    %128 = vdwg.mxu0
    %v129 = vmul.f32 %v126, 2.0
    %v130 = vsub.f32 2.0, %v129
    %v131 = vmax.f32 %v130, 1e-16
    %v132 = vrsqrt.pop %v131
    %v133 = vmin.f32 %v132, 1e+08
    %v134 = vld [vmem:[#allocation3] sm:$0xff]
    %vm135 = vcmask 64512
    %v136 = vsel %vm135, %v133, -inf
    %137 = vmax.xlane.f32.xlu0 %v136
    %v138 = vpop.xlane.xlu0 %137
    %v139 = vmax.f32 %v134, %v138
    %v140 = vsub.f32 %v134, %v139
    %v141 = vmul.f32 %v140, 1.442695
    %v142 = vpow.pop %v141
    %v143 = vld [vmem:[#allocation4] sm:$0xff]
    %v144 = vmul.f32 %v142, %v143
    %146 = vset.pattern.permute.xlu0 0
    %147 = vperm.xlu0 %146, %v139
    %v148 = vpop.permute.xlu0 %147
    %v150 = vsub.f32 %v133, %v148
    %v151 = vmul.f32 %v150, 1.442695
    %v152 = vpow.pop %v151
    %v153 = vsel %vm135, %v152, 0.0
    %154 = vadd.xlane.f32.xlu0 %v153
    %v155 = vpop.xlane.xlu0 %154
    %v156 = vadd.f32 %v144, %v155
    %vm157 = vcmask 7168
    %158 = vst.msk [vmem:[#allocation4] sm:$0xff] %vm157, %v156
    %159 = vst.msk [vmem:[#allocation3] sm:$0xff] %vm157, %v139
    %p160 = scmp.eq.s32.totalorder 0, 0
    // Predicated region
    $region22: #{tpu_custom_call.1} parent=1 // pred_check
      %p161 = pneg %p160
    $region23: #{tpu_custom_call.1} parent=1 // pred_check_branch
      %163 = sbr.rel (%p161) target = $region25
    $region24: #{tpu_custom_call.1} parent=1 // pred_region
      %v164 = vlaneseq
      %v165 = vshrl.u32 %v164, 7
      %v166 = vlaneseq
      %v167 = vand.u32 %v166, 127
      %vm168 = vcmp.eq.s32.totalorder %v165, %v167
      %v169 = vsel %vm168, %v133, 0.0
      %v170 = vsel %vm135, %v169, 0.0
      %171 = vadd.xlane.f32.xlu0 %v170
      %v172 = vpop.xlane.xlu0 %171
      %173 = vst.msk [vmem:[#allocation5] sm:$0xff] %vm157, %v172
    $region25: #{tpu_custom_call.1} parent=1 // pred_fallthru
      _
    // Predicated region
    $region26: #{tpu_custom_call.1} parent=1 // pred_check
      %p174 = pneg %p35
    $region27: #{tpu_custom_call.1} parent=1 // pred_check_branch
      %176 = sbr.rel (%p174) target = $region29
    $region28: #{tpu_custom_call.1} parent=1 // pred_region
      %v177 = vld [vmem:[#allocation3] sm:$0xff]
      %v178 = vld [vmem:[#allocation4] sm:$0xff]
      %v179 = vlog2.pop %v178
      %v180 = vmul.f32 %v179, 0.6931472
      %v181 = vadd.f32 %v177, %v180
      %v182 = vld [vmem:[#allocation5] sm:$0xff]
      %v183 = vsub.f32 %v181, %v182
      %184 = vst.msk [vmem:[%s2] sm:$0xff] %vm157, %v183
    $region29: #{tpu_custom_call.1} parent=1 // pred_fallthru
      _
    // Predicated region
    $region30: #{tpu_custom_call.1} parent=1 // pred_check
      _
    $region31: #{tpu_custom_call.1} parent=1 // pred_check_branch
      %186 = sbr.rel (0) target = $region33
    $region32: #{tpu_custom_call.1} parent=1 // pred_region
      _
    $region33: #{tpu_custom_call.1} parent=1 // pred_fallthru
      _
    // Predicated region
    $region34: #{tpu_custom_call.1} parent=1 // pred_check
      _
    $region35: #{tpu_custom_call.1} parent=1 // pred_check_branch
      %188 = sbr.rel (0) target = $region37
    $region36: #{tpu_custom_call.1} parent=1 // pred_region
      _
    $region37: #{tpu_custom_call.1} parent=1 // pred_fallthru
      _
    %189 = vsyncpa [#allocation7], 1
    %190 = vsyncpa [#allocation9], 1

</llo_original>
